<compile_context>
chip_gen: v7x
topology: tpu7x:2x2x1
jax: 0.10.0
libtpu: 0.0.40
codegen_flags: <defaults>
</compile_context>

<pallas_src>
import functools

import jax
import jax.numpy as jnp
from jax.experimental import pallas as pl
from jax.experimental.pallas import tpu as pltpu


_LANE = 128
# Budget for the double-buffered VMEM tiles.  Conservative enough for v7x's
# 64 MiB VMEM while still allowing >=512-lane tiles (~85% of HBM roofline).
_VMEM_TILE_BUDGET = 24 << 20


def _round_up(x, m):
    return ((x + m - 1) // m) * m


def _tile_bytes(tb, ts, tv, in_bytes, sat_bytes):
    """Double-buffered VMEM footprint of one grid step's tiles."""
    x_t = tb * ts * tv * in_bytes          # token-embedding input tile
    m_t = tb * ts * 1 * in_bytes           # attention-mask tile
    sat_t = tb * ts * tv * sat_bytes       # saturated output tile (0 if skipped)
    max_t = tb * 1 * tv * in_bytes         # resident running-max tile
    return 2 * (x_t + m_t + sat_t + max_t)


def _choose_tiles(B, S, V, in_bytes, sat_bytes, budget=_VMEM_TILE_BUDGET):
    """Pick (tb, ts, tv) so the double-buffered tiles fit `budget` bytes."""
    v128 = _round_up(V, _LANE)
    tb_cands = [t for t in (8, 4, 2, 1) if B % t == 0]
    tv_cands = []
    for tv in (2048, 1024, 512):
        tv = min(tv, v128)
        if tv not in tv_cands:
            tv_cands.append(tv)

    # Pass 1: whole sequence resident per grid step.  Prefer the tile that
    # minimizes V padding, then the widest lane tile, then batch blocking.
    best = None
    for tv in tv_cands:
        for tb in tb_cands:
            if _tile_bytes(tb, S, tv, in_bytes, sat_bytes) <= budget:
                key = (_round_up(V, tv) - V, -tv, -tb)
                if best is None or key < best[0]:
                    best = (key, (tb, S, tv))
                break  # largest batch block for this tv already found
    if best is not None:
        return best[1]

    # Pass 2: sequence too long for VMEM -> tile S instead of narrowing V
    # below 512 lanes (keeps lane-dense stores; running max accumulates
    # across S tiles in the resident output block).
    tv = min(512, v128)
    per_row = tv * (in_bytes + sat_bytes) + in_bytes
    avail = budget // 2 - tv * in_bytes
    ts = max(8, (avail // per_row) // 8 * 8)
    ts = int(min(ts, _round_up(S, 8)))
    return 1, ts, tv


def _splade_sat_and_max_kernel(x_ref, m_ref, sat_ref, max_ref):
    # x_ref  : (tb, ts, tv)  token-embedding tile
    # m_ref  : (tb, ts, 1)   attention-mask tile
    # sat_ref: (tb, ts, tv)  masked log1p(relu(x)) tile
    # max_ref: (tb, 1, tv)   running max over S (resident across the s axis)
    x = x_ref[...].astype(jnp.float32)
    m = m_ref[...].astype(jnp.float32)
    sat = jnp.log1p(jnp.maximum(x, 0.0)) * m
    sat_ref[...] = sat.astype(sat_ref.dtype)
    tile_max = jnp.max(sat, axis=1, keepdims=True)

    s = pl.program_id(2)

    @pl.when(s == 0)
    def _():
        max_ref[...] = tile_max.astype(max_ref.dtype)

    @pl.when(s > 0)
    def _():
        prev = max_ref[...].astype(jnp.float32)
        max_ref[...] = jnp.maximum(prev, tile_max).astype(max_ref.dtype)


def _splade_max_only_kernel(x_ref, m_ref, max_ref):
    # Pooled-only fast path: identical math, but the saturated activations
    # are never written back to HBM (roughly halves memory traffic).
    x = x_ref[...].astype(jnp.float32)
    m = m_ref[...].astype(jnp.float32)
    sat = jnp.log1p(jnp.maximum(x, 0.0)) * m
    tile_max = jnp.max(sat, axis=1, keepdims=True)

    s = pl.program_id(2)

    @pl.when(s == 0)
    def _():
        max_ref[...] = tile_max.astype(max_ref.dtype)

    @pl.when(s > 0)
    def _():
        prev = max_ref[...].astype(jnp.float32)
        max_ref[...] = jnp.maximum(prev, tile_max).astype(max_ref.dtype)


@functools.partial(jax.jit, static_argnames=("compute_saturated",))
def splade_pooler_large_memory(token_embeddings, attention_mask,
                               compute_saturated=True):
    """SPLADE pooler forward.

    token_embeddings: [B, S, V] (f32 or bf16); attention_mask: [B, S].
    Returns the same dict as the PyTorch module.  With
    compute_saturated=False the saturated activations are not materialized
    (pooled-only fast path, ~2x less HBM traffic).
    """
    B, S, V = token_embeddings.shape
    dtype = token_embeddings.dtype
    in_bytes = jnp.dtype(dtype).itemsize
    sat_bytes = in_bytes if compute_saturated else 0

    tb, ts, tv = _choose_tiles(B, S, V, in_bytes, sat_bytes)
    Sp = _round_up(S, ts)
    Vp = _round_up(V, tv)

    x = token_embeddings
    mask3 = attention_mask.astype(dtype).reshape(B, S, 1)
    if Sp != S or Vp != V:
        # Zero padding: padded columns/rows produce sat == 0 and are sliced
        # away below; they never affect valid lanes (all ops are lane-local).
        x = jnp.pad(x, ((0, 0), (0, Sp - S), (0, Vp - V)))
    if Sp != S:
        mask3 = jnp.pad(mask3, ((0, 0), (0, Sp - S), (0, 0)))

    grid = (B // tb, Vp // tv, Sp // ts)   # (batch blocks, V tiles, S tiles)

    x_spec = pl.BlockSpec((tb, ts, tv), lambda b, j, s: (b, s, j))
    m_spec = pl.BlockSpec((tb, ts, 1), lambda b, j, s: (b, s, 0))
    sat_spec = pl.BlockSpec((tb, ts, tv), lambda b, j, s: (b, s, j))
    max_spec = pl.BlockSpec((tb, 1, tv), lambda b, j, s: (b, 0, j))

    est = _tile_bytes(tb, ts, tv, in_bytes, sat_bytes)
    vmem_limit = int(min(48 << 20, max(32 << 20, est + (8 << 20))))
    compiler_params = pltpu.CompilerParams(
        dimension_semantics=("parallel", "parallel", "arbitrary"),
        vmem_limit_bytes=vmem_limit,
    )

    if compute_saturated:
        sat_p, sent_p = pl.pallas_call(
            _splade_sat_and_max_kernel,
            out_shape=(
                jax.ShapeDtypeStruct((B, Sp, Vp), dtype),
                jax.ShapeDtypeStruct((B, 1, Vp), dtype),
            ),
            grid_spec=pltpu.PrefetchScalarGridSpec(
                num_scalar_prefetch=0,
                grid=grid,
                in_specs=[x_spec, m_spec],
                out_specs=[sat_spec, max_spec],
            ),
            compiler_params=compiler_params,
        )(x, mask3)
        sat = sat_p[:, :S, :V]
        sent = sent_p[:, 0, :V]
        return {
            "saturated_token_embeddings": sat,
            "sentence_embedding": sent,
            "sparse_sentence_embedding": sent,
        }

    sent_p = pl.pallas_call(
        _splade_max_only_kernel,
        out_shape=jax.ShapeDtypeStruct((B, 1, Vp), dtype),
        grid_spec=pltpu.PrefetchScalarGridSpec(
            num_scalar_prefetch=0,
            grid=grid,
            in_specs=[x_spec, m_spec],
            out_specs=max_spec,
        ),
        compiler_params=compiler_params,
    )(x, mask3)
    sent = sent_p[:, 0, :V]
    return {
        "sentence_embedding": sent,
        "sparse_sentence_embedding": sent,
    }


def _reference(token_embeddings, attention_mask):
    sat = jnp.log1p(jnp.maximum(token_embeddings, 0.0))
    sat = sat * attention_mask.astype(token_embeddings.dtype)[..., None]
    sent = jnp.max(sat, axis=1)
    return sat, sent


if __name__ == "__main__":
    key = jax.random.PRNGKey(0)
    k1, k2, k3, k4 = jax.random.split(key, 4)

    # --- Test 1: aligned small shapes (batch=2, seq=8, vocab=256). ---
    B, S, V = 2, 8, 256
    token_embeddings = jax.random.normal(k1, (B, S, V), dtype=jnp.float32)
    lens = jnp.array([6, 4], dtype=jnp.int32)
    attention_mask = (jnp.arange(S)[None, :] < lens[:, None]).astype(jnp.float32)

    out = splade_pooler_large_memory(token_embeddings, attention_mask)
    jax.block_until_ready(out)

    ref_sat, ref_sent = _reference(token_embeddings, attention_mask)
    assert out["saturated_token_embeddings"].shape == (B, S, V)
    assert out["sentence_embedding"].shape == (B, V)
    assert jnp.allclose(out["saturated_token_embeddings"], ref_sat,
                        atol=1e-5, rtol=1e-5)
    assert jnp.allclose(out["sentence_embedding"], ref_sent,
                        atol=1e-5, rtol=1e-5)
    assert jnp.allclose(out["sparse_sentence_embedding"], ref_sent,
                        atol=1e-5, rtol=1e-5)

    # Pooled-only fast path (no saturated writeback).
    out_fast = splade_pooler_large_memory(token_embeddings, attention_mask,
                                          compute_saturated=False)
    jax.block_until_ready(out_fast)
    assert jnp.allclose(out_fast["sentence_embedding"], ref_sent,
                        atol=1e-5, rtol=1e-5)

    # --- Test 2: unaligned V/S (exercises the padding path). ---
    B2, S2, V2 = 2, 10, 200
    x2 = jax.random.normal(k3, (B2, S2, V2), dtype=jnp.float32)
    mask2 = (jax.random.uniform(k4, (B2, S2)) > 0.3).astype(jnp.float32)
    out2 = splade_pooler_large_memory(x2, mask2)
    jax.block_until_ready(out2)
    ref_sat2, ref_sent2 = _reference(x2, mask2)
    assert out2["saturated_token_embeddings"].shape == (B2, S2, V2)
    assert out2["sentence_embedding"].shape == (B2, V2)
    assert jnp.allclose(out2["saturated_token_embeddings"], ref_sat2,
                        atol=1e-5, rtol=1e-5)
    assert jnp.allclose(out2["sentence_embedding"], ref_sent2,
                        atol=1e-5, rtol=1e-5)

    print("KERNEL_OK")
</pallas_src>

<mosaic_0001>
module attributes {stable_mosaic.version = 11 : i64} {
  func.func @_splade_sat_and_max_kernel(%arg0: i32, %arg1: i32, %arg2: i32, %arg3: memref<2x8x256xf32, #tpu.memory_space<vmem>>, %arg4: memref<2x8x1xf32, #tpu.memory_space<vmem>>, %arg5: memref<2x8x256xf32, #tpu.memory_space<vmem>>, %arg6: memref<2x1x256xf32, #tpu.memory_space<vmem>>) attributes {dimension_semantics = [#tpu.dimension_semantics<parallel>, #tpu.dimension_semantics<parallel>, #tpu.dimension_semantics<arbitrary>], iteration_bounds = array<i64: 1, 1, 1>, scalar_prefetch = 0 : i64, scratch_operands = 0 : i64, tpu.core_type = #tpu.core_type<tc>, window_params = [{transform_indices = @transform_0, window_bounds = array<i64: 2, 8, 256>}, {transform_indices = @transform_1, window_bounds = array<i64: 2, 8, 1>}, {transform_indices = @transform_2, window_bounds = array<i64: 2, 8, 256>}, {transform_indices = @transform_3, window_bounds = array<i64: 2, 1, 256>}]} {
    %c0 = arith.constant 0 : index
    %c0_0 = arith.constant 0 : index
    %c0_1 = arith.constant 0 : index
    %0 = vector.load %arg3[%c0, %c0_0, %c0_1] : memref<2x8x256xf32, #tpu.memory_space<vmem>>, vector<2x8x256xf32>
    %c0_2 = arith.constant 0 : index
    %c0_3 = arith.constant 0 : index
    %c0_4 = arith.constant 0 : index
    %1 = vector.load %arg4[%c0_2, %c0_3, %c0_4] : memref<2x8x1xf32, #tpu.memory_space<vmem>>, vector<2x8x1xf32>
    %cst = arith.constant 0.000000e+00 : f32
    %2 = vector.broadcast %cst : f32 to vector<2x8x256xf32>
    %3 = arith.maximumf %0, %2 : vector<2x8x256xf32>
    %4 = math.log1p %3 : vector<2x8x256xf32>
    %5 = vector.broadcast %1 : vector<2x8x1xf32> to vector<2x8x256xf32>
    %6 = arith.mulf %4, %5 : vector<2x8x256xf32>
    %c0_5 = arith.constant 0 : index
    %c0_6 = arith.constant 0 : index
    %c0_7 = arith.constant 0 : index
    %7 = vector.load %arg5[%c0_5, %c0_6, %c0_7] : memref<2x8x256xf32, #tpu.memory_space<vmem>>, vector<2x8x256xf32>
    tpu.vector_store %arg5[%c0_5, %c0_6, %c0_7], %6 {strides = array<i32>} : memref<2x8x256xf32, #tpu.memory_space<vmem>>, vector<2x8x256xf32>,
    %cst_8 = arith.constant dense<0xFF800000> : vector<2x256xf32>
    %8 = vector.multi_reduction <maximumf>, %6, %cst_8 [1] : vector<2x8x256xf32> to vector<2x256xf32>
    %9 = vector.shape_cast %8 : vector<2x256xf32> to vector<2x1x256xf32>
    %c0_i32 = arith.constant 0 : i32
    %10 = arith.cmpi eq, %arg2, %c0_i32 : i32
    %11 = arith.extui %10 : i1 to i32
    %c0_i32_9 = arith.constant 0 : i32
    %12 = arith.cmpi ne, %11, %c0_i32_9 : i32
    scf.if %12 {
      %c0_12 = arith.constant 0 : index
      %c0_13 = arith.constant 0 : index
      %c0_14 = arith.constant 0 : index
      %16 = vector.load %arg6[%c0_12, %c0_13, %c0_14] : memref<2x1x256xf32, #tpu.memory_space<vmem>>, vector<2x1x256xf32>
      tpu.vector_store %arg6[%c0_12, %c0_13, %c0_14], %9 {strides = array<i32>} : memref<2x1x256xf32, #tpu.memory_space<vmem>>, vector<2x1x256xf32>,
    } else {
    }
    %c0_i32_10 = arith.constant 0 : i32
    %13 = arith.cmpi sgt, %arg2, %c0_i32_10 : i32
    %14 = arith.extui %13 : i1 to i32
    %c0_i32_11 = arith.constant 0 : i32
    %15 = arith.cmpi ne, %14, %c0_i32_11 : i32
    scf.if %15 {
      %c0_12 = arith.constant 0 : index
      %c0_13 = arith.constant 0 : index
      %c0_14 = arith.constant 0 : index
      %16 = vector.load %arg6[%c0_12, %c0_13, %c0_14] : memref<2x1x256xf32, #tpu.memory_space<vmem>>, vector<2x1x256xf32>
      %17 = arith.maximumf %16, %9 : vector<2x1x256xf32>
      %c0_15 = arith.constant 0 : index
      %c0_16 = arith.constant 0 : index
      %c0_17 = arith.constant 0 : index
      %18 = vector.load %arg6[%c0_15, %c0_16, %c0_17] : memref<2x1x256xf32, #tpu.memory_space<vmem>>, vector<2x1x256xf32>
      tpu.vector_store %arg6[%c0_15, %c0_16, %c0_17], %17 {strides = array<i32>} : memref<2x1x256xf32, #tpu.memory_space<vmem>>, vector<2x1x256xf32>,
    } else {
    }
    return
  }
  func.func @transform_0(%arg0: i32, %arg1: i32, %arg2: i32) -> (i32, i32, i32) {
    %c0_i32 = arith.constant 0 : i32
    return %arg0, %arg2, %arg1 : i32, i32, i32
  }
  func.func @transform_1(%arg0: i32, %arg1: i32, %arg2: i32) -> (i32, i32, i32) {
    %c0_i32 = arith.constant 0 : i32
    %c0_i32_0 = arith.constant 0 : i32
    return %arg0, %arg2, %c0_i32 : i32, i32, i32
  }
  func.func @transform_2(%arg0: i32, %arg1: i32, %arg2: i32) -> (i32, i32, i32) {
    %c0_i32 = arith.constant 0 : i32
    return %arg0, %arg2, %arg1 : i32, i32, i32
  }
  func.func @transform_3(%arg0: i32, %arg1: i32, %arg2: i32) -> (i32, i32, i32) {
    %c0_i32 = arith.constant 0 : i32
    %c0_i32_0 = arith.constant 0 : i32
    return %arg0, %c0_i32, %arg1 : i32, i32, i32
  }
}

</mosaic_0001>

<llo_original>
// kernel: splade_pooler_large_memory.1
$region0: #{splade_pooler_large_memory.1}
  #allocation0 [shape = 'u32[]', space=smem, size = 0x4, offset = 0x4, fixed_abs, tag = 'smem constant byte address 0x4 - core index']
  #allocation1 [shape = 'u32[144,128]{1,0:T(1,128)}', space=vmem, size = 0x12000, scoped, tag = 'internal scratch']
  %s0 = inlined_call_operand.hbm [shape: f32[2,8,256], index: 0, kind: input, shape index: {}]
  %s1 = inlined_call_operand.vmem [shape: f32[2,8,1], index: 1, kind: input, shape index: {}]
  %s2 = inlined_call_operand.hbm [shape: f32[2,8,256], index: 2, kind: output, shape index: {0}]
  %s3 = inlined_call_operand.vmem [shape: f32[2,1,256], index: 3, kind: output, shape index: {1}]
  %4 = xla_tuple %s2, %s3
  %s5 = sld [smem:[#allocation0]]
  $region38: #{splade_pooler_large_memory.1} parent=0
    _
  %s7 = ssub.s32 1, %s5
  %s8 = scalar_select 0, %s7, %s5
  $region1: #{splade_pooler_large_memory.1} parent=0
    #allocation2 [shape = 'u8[16384]{0}', space=vmem, size = 0x4000, scoped, tag = 'input window, operand 0, single buffered']
    #allocation3 [shape = 's32[1]{0}', space=sflag, size = 0x4, scoped, tag = 'scoped memory for splade_pooler_large_memory.1']
    #allocation4 [shape = 's32[1]{0}', space=sflag, size = 0x4, scoped, tag = 'scoped memory for splade_pooler_large_memory.1']
    #allocation5 [shape = 'u8[16384]{0}', space=vmem, size = 0x4000, scoped, tag = 'output window, operand 0, single buffered']
    %9 = vsyncpa [#allocation3], 0
    %10 = vsyncpa [#allocation4], 0
    // Predicated region
    $region2: #{splade_pooler_large_memory.1} parent=1 // pred_check
      _
    $region3: #{splade_pooler_large_memory.1} parent=1 // pred_check_branch
      %12 = sbr.rel (0) target = $region5
    $region4: #{splade_pooler_large_memory.1} parent=1 // pred_region
      %s14 = ssub.s32 512, 512
      %15 = vsyncadd [#allocation3], %s14
      %s16 = sshll.u32 [#allocation2], 4
      %s17 = int_to_ptr.vmem [resolvable:$true] %s16
      %22 = dma.hbm_to_vmem [thread:$0]  %s0, 512, %s17, [#allocation3], 256, 256, 16
    $region5: #{splade_pooler_large_memory.1} parent=1 // pred_fallthru
      _
    // Predicated region
    $region6: #{splade_pooler_large_memory.1} parent=1 // pred_check
      _
    $region7: #{splade_pooler_large_memory.1} parent=1 // pred_check_branch
      %24 = sbr.rel (0) target = $region9
    $region8: #{splade_pooler_large_memory.1} parent=1 // pred_region
      _
    $region9: #{splade_pooler_large_memory.1} parent=1 // pred_fallthru
      _
    // Predicated region
    $region10: #{splade_pooler_large_memory.1} parent=1 // pred_check
      _
    $region11: #{splade_pooler_large_memory.1} parent=1 // pred_check_branch
      %26 = sbr.rel (0) target = $region13
    $region12: #{splade_pooler_large_memory.1} parent=1 // pred_region
      %27 = dma.done [#allocation3], 512
    $region13: #{splade_pooler_large_memory.1} parent=1 // pred_fallthru
      _
    %v28 = vld [vmem:[#allocation2] sm:$0xff]
    %v29 = vld [vmem:[#allocation2 + $0x8] sm:$0xff]
    %v30 = vld [vmem:[#allocation2 + $0x10] sm:$0xff]
    %v31 = vld [vmem:[#allocation2 + $0x18] sm:$0xff]
    %v32 = vld [vmem:[%s1] sm:$0xff]
    %v33 = vld [vmem:[%s1 + $0x8] sm:$0xff]
    %v34 = vmax.f32 %v28, 0.0
    %v35 = vmax.f32 %v29, 0.0
    %v36 = vmax.f32 %v30, 0.0
    %v37 = vmax.f32 %v31, 0.0
    %v38 = vadd.f32 %v34, 1.0
    %v39 = vlog2.pop %v38
    %v40 = vmul.f32 %v39, 0.6931472
    %v41 = vmul.f32 -0.5, %v34
    %v42 = vadd.f32 %v41, 1.0
    %v43 = vmul.f32 %v42, %v34
    %v44 = vand.u32 2147483647, %v34
    %vm45 = vcmp.lt.f32.partialorder %v44, 0.0004427343
    %v46 = vsel %vm45, %v43, %v40
    %v47 = vadd.f32 %v35, 1.0
    %v48 = vlog2.pop %v47
    %v49 = vmul.f32 %v48, 0.6931472
    %v50 = vmul.f32 -0.5, %v35
    %v51 = vadd.f32 %v50, 1.0
    %v52 = vmul.f32 %v51, %v35
    %v53 = vand.u32 2147483647, %v35
    %vm54 = vcmp.lt.f32.partialorder %v53, 0.0004427343
    %v55 = vsel %vm54, %v52, %v49
    %v56 = vadd.f32 %v36, 1.0
    %v57 = vlog2.pop %v56
    %v58 = vmul.f32 %v57, 0.6931472
    %v59 = vmul.f32 -0.5, %v36
    %v60 = vadd.f32 %v59, 1.0
    %v61 = vmul.f32 %v60, %v36
    %v62 = vand.u32 2147483647, %v36
    %vm63 = vcmp.lt.f32.partialorder %v62, 0.0004427343
    %v64 = vsel %vm63, %v61, %v58
    %v65 = vadd.f32 %v37, 1.0
    %v66 = vlog2.pop %v65
    %v67 = vmul.f32 %v66, 0.6931472
    %v68 = vmul.f32 -0.5, %v37
    %v69 = vadd.f32 %v68, 1.0
    %v70 = vmul.f32 %v69, %v37
    %v71 = vand.u32 2147483647, %v37
    %vm72 = vcmp.lt.f32.partialorder %v71, 0.0004427343
    %v73 = vsel %vm72, %v70, %v67
    %75 = vset.pattern.permute.xlu0 0
    %76 = vperm.xlu0 %75, %v32
    %v77 = vpop.permute.xlu0 %76
    %80 = vset.pattern.permute.xlu0 0
    %81 = vperm.xlu0 %80, %v33
    %v82 = vpop.permute.xlu0 %81
    %v84 = vmul.f32 %v46, %v77
    %v85 = vmul.f32 %v55, %v77
    %v86 = vmul.f32 %v64, %v82
    %v87 = vmul.f32 %v73, %v82
    %88 = vst [vmem:[#allocation5] sm:$0xff] %v84
    %89 = vst [vmem:[#allocation5 + $0x8] sm:$0xff] %v85
    %90 = vst [vmem:[#allocation5 + $0x10] sm:$0xff] %v86
    %91 = vst [vmem:[#allocation5 + $0x18] sm:$0xff] %v87
    %v92 = vrot.slane %v84, 4
    %v93 = vmax.f32 %v84, %v92
    %v94 = vrot.slane %v93, 2
    %v95 = vmax.f32 %v93, %v94
    %v96 = vrot.slane %v95, 1
    %v97 = vmax.f32 %v95, %v96
    %v98 = vrot.slane %v85, 4
    %v99 = vmax.f32 %v85, %v98
    %v100 = vrot.slane %v99, 2
    %v101 = vmax.f32 %v99, %v100
    %v102 = vrot.slane %v101, 1
    %v103 = vmax.f32 %v101, %v102
    %v104 = vrot.slane %v86, 4
    %v105 = vmax.f32 %v86, %v104
    %v106 = vrot.slane %v105, 2
    %v107 = vmax.f32 %v105, %v106
    %v108 = vrot.slane %v107, 1
    %v109 = vmax.f32 %v107, %v108
    %v110 = vrot.slane %v87, 4
    %v111 = vmax.f32 %v87, %v110
    %v112 = vrot.slane %v111, 2
    %v113 = vmax.f32 %v111, %v112
    %v114 = vrot.slane %v113, 1
    %v115 = vmax.f32 %v113, %v114
    %p116 = scmp.eq.s32.totalorder 0, 0
    // Predicated region
    $region14: #{splade_pooler_large_memory.1} parent=1 // pred_check
      %p117 = pneg %p116
    $region15: #{splade_pooler_large_memory.1} parent=1 // pred_check_branch
      %119 = sbr.rel (%p117) target = $region17
    $region16: #{splade_pooler_large_memory.1} parent=1 // pred_region
      %v124 = vcombine.low %v97, %v103
      %v126 = vunpack.c.l.s4 1966171168
      %v127 = vunpack.c.0.s8 %v126
      %v128 = vlaneseq
      %v129 = vshrl.u32 %v128, 7
      %v130 = vsub.s32 %v127, %v129
      %v131 = vrot.slane %v124, %v130
      %v133 = vunpack.c.l.s4 1966171168
      %v134 = vunpack.c.0.s8 %v133
      %v135 = vlaneseq
      %v136 = vshrl.u32 %v135, 7
      %v137 = vsub.s32 %v134, %v136
      %v138 = vrot.slane %v131, %v137
      %v139 = vcombine.low %v109, %v115
      %v141 = vunpack.c.l.s4 1966171168
      %v142 = vunpack.c.0.s8 %v141
      %v143 = vlaneseq
      %v144 = vshrl.u32 %v143, 7
      %v145 = vsub.s32 %v142, %v144
      %v146 = vrot.slane %v139, %v145
      %v148 = vunpack.c.l.s4 1966171168
      %v149 = vunpack.c.0.s8 %v148
      %v150 = vlaneseq
      %v151 = vshrl.u32 %v150, 7
      %v152 = vsub.s32 %v149, %v151
      %v153 = vrot.slane %v146, %v152
      %v156 = vlaneseq
      %vm157 = vcmp.ge.s32.totalorder %v156, 0
      %vm158 = vcmp.lt.s32.totalorder %v156, 256
      %vm159 = vmand %vm157, %vm158
      %160 = vst.msk [vmem:[%s3] sm:$0x3] %vm159, %v138
      %161 = vst.msk [vmem:[%s3 + $0x2] sm:$0x3] %vm159, %v153
    $region17: #{splade_pooler_large_memory.1} parent=1 // pred_fallthru
      _
    %p162 = scmp.gt.s32.totalorder 0, 0
    // Predicated region
    $region18: #{splade_pooler_large_memory.1} parent=1 // pred_check
      %p163 = pneg %p162
    $region19: #{splade_pooler_large_memory.1} parent=1 // pred_check_branch
      %165 = sbr.rel (%p163) target = $region21
    $region20: #{splade_pooler_large_memory.1} parent=1 // pred_region
      %v166 = vld [vmem:[%s3] sm:$0x3]
      %v167 = vld [vmem:[%s3 + $0x2] sm:$0x3]
      %v172 = vcombine.low %v97, %v103
      %v174 = vunpack.c.l.s4 1966171168
      %v175 = vunpack.c.0.s8 %v174
      %v176 = vlaneseq
      %v177 = vshrl.u32 %v176, 7
      %v178 = vsub.s32 %v175, %v177
      %v179 = vrot.slane %v172, %v178
      %v181 = vunpack.c.l.s4 1966171168
      %v182 = vunpack.c.0.s8 %v181
      %v183 = vlaneseq
      %v184 = vshrl.u32 %v183, 7
      %v185 = vsub.s32 %v182, %v184
      %v186 = vrot.slane %v179, %v185
      %v187 = vcombine.low %v109, %v115
      %v189 = vunpack.c.l.s4 1966171168
      %v190 = vunpack.c.0.s8 %v189
      %v191 = vlaneseq
      %v192 = vshrl.u32 %v191, 7
      %v193 = vsub.s32 %v190, %v192
      %v194 = vrot.slane %v187, %v193
      %v196 = vunpack.c.l.s4 1966171168
      %v197 = vunpack.c.0.s8 %v196
      %v198 = vlaneseq
      %v199 = vshrl.u32 %v198, 7
      %v200 = vsub.s32 %v197, %v199
      %v201 = vrot.slane %v194, %v200
      %v204 = vmax.f32 %v166, %v186
      %v205 = vmax.f32 %v167, %v201
      %v206 = vlaneseq
      %vm207 = vcmp.ge.s32.totalorder %v206, 0
      %vm208 = vcmp.lt.s32.totalorder %v206, 256
      %vm209 = vmand %vm207, %vm208
      %210 = vst.msk [vmem:[%s3] sm:$0x3] %vm209, %v204
      %211 = vst.msk [vmem:[%s3 + $0x2] sm:$0x3] %vm209, %v205
    $region21: #{splade_pooler_large_memory.1} parent=1 // pred_fallthru
      _
    // Predicated region
    $region22: #{splade_pooler_large_memory.1} parent=1 // pred_check
      _
    $region23: #{splade_pooler_large_memory.1} parent=1 // pred_check_branch
      %213 = sbr.rel (0) target = $region25
    $region24: #{splade_pooler_large_memory.1} parent=1 // pred_region
      %s215 = ssub.s32 512, 512
      %216 = vsyncadd [#allocation4], %s215
      %s217 = sshll.u32 [#allocation5], 4
      %s218 = int_to_ptr.vmem [resolvable:$true] %s217
      %223 = dma.vmem_to_hbm [thread:$0]  %s218, 512, %s2, [#allocation4], 256, 256, 16
    $region25: #{splade_pooler_large_memory.1} parent=1 // pred_fallthru
      _
    // Predicated region
    $region26: #{splade_pooler_large_memory.1} parent=1 // pred_check
      _
    $region27: #{splade_pooler_large_memory.1} parent=1 // pred_check_branch
      %225 = sbr.rel (0) target = $region29
    $region28: #{splade_pooler_large_memory.1} parent=1 // pred_region
      _
    $region29: #{splade_pooler_large_memory.1} parent=1 // pred_fallthru
      _
    // Predicated region
    $region30: #{splade_pooler_large_memory.1} parent=1 // pred_check
      _
    $region31: #{splade_pooler_large_memory.1} parent=1 // pred_check_branch
      %227 = sbr.rel (0) target = $region33
    $region32: #{splade_pooler_large_memory.1} parent=1 // pred_region
      %228 = dma.done [#allocation4], 512
    $region33: #{splade_pooler_large_memory.1} parent=1 // pred_fallthru
      _
    // Predicated region
    $region34: #{splade_pooler_large_memory.1} parent=1 // pred_check
      _
    $region35: #{splade_pooler_large_memory.1} parent=1 // pred_check_branch
      %230 = sbr.rel (0) target = $region37
    $region36: #{splade_pooler_large_memory.1} parent=1 // pred_region
      _
    $region37: #{splade_pooler_large_memory.1} parent=1 // pred_fallthru
      _
    %231 = vsyncpa [#allocation3], 1
    %232 = vsyncpa [#allocation4], 1

</llo_original>
